<compile_context>
chip_gen: v7x
topology: tpu7x:2x2x1
jax: 0.10.0
libtpu: 0.0.40
codegen_flags: <defaults>
</compile_context>

<pallas_src>
import functools
import math

import jax
import jax.numpy as jnp
from jax.experimental import pallas as pl
from jax.experimental.pallas import tpu as pltpu


def _envelope_kernel(ab_ref, sig_ref, out_ref, *, n_samples, factor, tile_n):
    # ab_ref: (tile_r, 2) packed [a, b]; sig_ref/out_ref: (tile_r, tile_n)
    j = pl.program_id(1)                                     # sample-tile index

    ab = ab_ref[...].astype(jnp.float32)                     # tiny block
    mean = ab[:, 0:1]                                        # (tile_r, 1)
    std = (jnp.abs(ab[:, 1:2]) + 1e-12) * jnp.float32(factor)
    inv_std = 1.0 / std                                      # per-row scalar column
    norm = inv_std * jnp.float32(1.0 / math.sqrt(2.0 * math.pi))

    # Thin lane iota: (1, tile_n) int32 (exact), broadcast against per-row stats.
    # torch.linspace(0, 1, n_samples) -> t_i = i / (n_samples - 1)
    step = jnp.float32(1.0 / (n_samples - 1)) if n_samples > 1 else jnp.float32(0.0)
    col = jax.lax.broadcasted_iota(jnp.int32, (1, tile_n), 1) + j * tile_n
    t = col.astype(jnp.float32) * step                       # (1, tile_n)

    z = (t - mean) * inv_std                                 # (tile_r, tile_n)
    pdf = jnp.exp(-0.5 * (z * z)) * norm

    out_ref[...] = (sig_ref[...].astype(jnp.float32) * pdf).astype(out_ref.dtype)


def _largest_divisor(total, cap, align):
    """Largest d <= cap with total % d == 0 and d % align == 0, else None."""
    cap = min(cap, total)
    cap -= cap % align
    for d in range(cap, 0, -align):
        if total % d == 0:
            return d
    return None


def envelope_and_position(signals, a, b, *, gaussian_envelope_factor=0.1,
                          block_byte_target=4 * 1024 * 1024):
    """Gaussian EnvelopeAndPosition forward.

    signals: (batch, n_events, n_samples)   a, b: (batch, n_events)
    returns positioned_signals with the same shape/dtype as `signals`.
    """
    batch, n_events, n_samples = signals.shape
    assert a.shape == (batch, n_events) and b.shape == (batch, n_events)

    rows = batch * n_events
    sig2d = signals.reshape(rows, n_samples)                 # free view, no HBM pass
    ab = jnp.stack([a.reshape(rows), b.reshape(rows)], axis=1)  # (rows, 2), tiny

    itemsize = jnp.dtype(signals.dtype).itemsize
    # sublane packing: f32 -> 8, bf16 -> 16, int8/fp8 -> 32
    sub_align = {4: 8, 2: 16, 1: 32}.get(itemsize, 8)

    # Row tile: largest aligned divisor of rows (no padding of the big tensor);
    # fall back to full row extent (legal: block dim == full array dim).
    tile_r = _largest_divisor(rows, 512, sub_align) or rows

    # Lane tile: largest 128-aligned divisor of n_samples under the per-block
    # byte budget; fall back to full lane extent.
    max_n_by_budget = max(128, block_byte_target // (itemsize * tile_r))
    tile_n = _largest_divisor(n_samples, max_n_by_budget, 128) or n_samples
    # NOTE: if both axes fall back to full extents for huge, oddly-shaped inputs
    # the block could exceed VMEM; typical audio shapes never hit this.

    grid = (rows // tile_r, n_samples // tile_n)

    kernel = functools.partial(
        _envelope_kernel,
        n_samples=n_samples,
        factor=float(gaussian_envelope_factor),
        tile_n=tile_n,
    )

    out2d = pl.pallas_call(
        kernel,
        out_shape=jax.ShapeDtypeStruct((rows, n_samples), signals.dtype),
        grid_spec=pltpu.PrefetchScalarGridSpec(
            num_scalar_prefetch=0,
            grid=grid,
            in_specs=[
                # a/b packed: block index constant across j -> fetched once per row-tile
                pl.BlockSpec((tile_r, 2), lambda i, j: (i, 0)),
                pl.BlockSpec((tile_r, tile_n), lambda i, j: (i, j)),
            ],
            out_specs=pl.BlockSpec((tile_r, tile_n), lambda i, j: (i, j)),
        ),
        compiler_params=pltpu.CompilerParams(
            dimension_semantics=("parallel", "parallel"),
            # in + out, double-buffered, <= ~16 MiB with 4 MiB blocks; 32 MiB scoped
            # limit is safe on v5e/v6e (128 MiB physical) and v7x (64 MiB/TC).
            vmem_limit_bytes=32 * 1024 * 1024,
        ),
    )(ab, sig2d)

    return out2d.reshape(batch, n_events, n_samples)


def _reference(signals, a, b, factor=0.1):
    n_samples = signals.shape[-1]
    t = jnp.linspace(0.0, 1.0, n_samples, dtype=jnp.float32)[None, None, :]
    mean = a[..., None].astype(jnp.float32)
    std = (jnp.abs(b[..., None].astype(jnp.float32)) + 1e-12) * factor
    pdf = jnp.exp(-0.5 * ((t - mean) / std) ** 2) / (std * jnp.sqrt(2.0 * jnp.pi))
    return (signals.astype(jnp.float32) * pdf).astype(signals.dtype)


if __name__ == "__main__":
    batch, n_events, n_samples = 2, 4, 1024

    key = jax.random.PRNGKey(0)
    k1, k2, k3 = jax.random.split(key, 3)
    signals = jax.random.normal(k1, (batch, n_events, n_samples), dtype=jnp.float32)
    a = jax.random.uniform(k2, (batch, n_events), dtype=jnp.float32)             # centers in [0,1)
    b = jax.random.normal(k3, (batch, n_events), dtype=jnp.float32) * 0.5 + 1.0  # widths

    out = envelope_and_position(signals, a, b, gaussian_envelope_factor=0.1)
    out = jax.block_until_ready(out)

    ref = _reference(signals, a, b, factor=0.1)
    assert out.shape == (batch, n_events, n_samples)
    assert jnp.allclose(out, ref, rtol=1e-4, atol=1e-4), "mismatch vs reference"

    print("KERNEL_OK")
</pallas_src>

<mosaic_0001>
module attributes {stable_mosaic.version = 11 : i64} {
  func.func @_envelope_kernel(%arg0: i32, %arg1: i32, %arg2: memref<8x2xf32, #tpu.memory_space<vmem>>, %arg3: memref<8x1024xf32, #tpu.memory_space<vmem>>, %arg4: memref<8x1024xf32, #tpu.memory_space<vmem>>) attributes {dimension_semantics = [#tpu.dimension_semantics<parallel>, #tpu.dimension_semantics<parallel>], iteration_bounds = array<i64: 1, 1>, scalar_prefetch = 0 : i64, scratch_operands = 0 : i64, tpu.core_type = #tpu.core_type<tc>, window_params = [{transform_indices = @transform_0, window_bounds = array<i64: 8, 2>}, {transform_indices = @transform_1, window_bounds = array<i64: 8, 1024>}, {transform_indices = @transform_2, window_bounds = array<i64: 8, 1024>}]} {
    %c0 = arith.constant 0 : index
    %c0_0 = arith.constant 0 : index
    %0 = vector.load %arg2[%c0, %c0_0] : memref<8x2xf32, #tpu.memory_space<vmem>>, vector<8x2xf32>
    %1 = vector.extract_strided_slice %0 {offsets = [0, 0], sizes = [8, 1], strides = [1, 1]} : vector<8x2xf32> to vector<8x1xf32>
    %2 = vector.extract_strided_slice %0 {offsets = [0, 1], sizes = [8, 1], strides = [1, 1]} : vector<8x2xf32> to vector<8x1xf32>
    %3 = math.absf %2 : vector<8x1xf32>
    %cst = arith.constant 9.99999996E-13 : f32
    %4 = vector.broadcast %cst : f32 to vector<8x1xf32>
    %5 = arith.addf %3, %4 : vector<8x1xf32>
    %cst_1 = arith.constant 1.000000e-01 : f32
    %6 = vector.broadcast %cst_1 : f32 to vector<8x1xf32>
    %7 = arith.mulf %5, %6 : vector<8x1xf32>
    %cst_2 = arith.constant 1.000000e+00 : f32
    %8 = vector.broadcast %cst_2 : f32 to vector<8x1xf32>
    %9 = arith.divf %8, %7 : vector<8x1xf32>
    %cst_3 = arith.constant 0.398942292 : f32
    %10 = vector.broadcast %cst_3 : f32 to vector<8x1xf32>
    %11 = arith.mulf %9, %10 : vector<8x1xf32>
    %12 = tpu.iota {dimensions = array<i32: 1>} : vector<1x1024xi32>
    %c1024_i32 = arith.constant 1024 : i32
    %13 = arith.muli %arg1, %c1024_i32 : i32
    %14 = vector.broadcast %13 : i32 to vector<1x1024xi32>
    %15 = arith.addi %12, %14 : vector<1x1024xi32>
    %16 = arith.sitofp %15 : vector<1x1024xi32> to vector<1x1024xf32>
    %cst_4 = arith.constant 9.77517105E-4 : f32
    %17 = vector.broadcast %cst_4 : f32 to vector<1x1024xf32>
    %18 = arith.mulf %16, %17 : vector<1x1024xf32>
    %19 = vector.broadcast %18 : vector<1x1024xf32> to vector<8x1024xf32>
    %20 = vector.broadcast %1 : vector<8x1xf32> to vector<8x1024xf32>
    %21 = arith.subf %19, %20 : vector<8x1024xf32>
    %22 = vector.broadcast %9 : vector<8x1xf32> to vector<8x1024xf32>
    %23 = arith.mulf %21, %22 : vector<8x1024xf32>
    %24 = arith.mulf %23, %23 : vector<8x1024xf32>
    %cst_5 = arith.constant -5.000000e-01 : f32
    %25 = vector.broadcast %cst_5 : f32 to vector<8x1024xf32>
    %26 = arith.mulf %25, %24 : vector<8x1024xf32>
    %27 = math.exp %26 : vector<8x1024xf32>
    %28 = vector.broadcast %11 : vector<8x1xf32> to vector<8x1024xf32>
    %29 = arith.mulf %27, %28 : vector<8x1024xf32>
    %c0_6 = arith.constant 0 : index
    %c0_7 = arith.constant 0 : index
    %30 = vector.load %arg3[%c0_6, %c0_7] : memref<8x1024xf32, #tpu.memory_space<vmem>>, vector<8x1024xf32>
    %31 = arith.mulf %30, %29 : vector<8x1024xf32>
    %c0_8 = arith.constant 0 : index
    %c0_9 = arith.constant 0 : index
    %32 = vector.load %arg4[%c0_8, %c0_9] : memref<8x1024xf32, #tpu.memory_space<vmem>>, vector<8x1024xf32>
    tpu.vector_store %arg4[%c0_8, %c0_9], %31 {strides = array<i32>} : memref<8x1024xf32, #tpu.memory_space<vmem>>, vector<8x1024xf32>,
    return
  }
  func.func @transform_0(%arg0: i32, %arg1: i32) -> (i32, i32) {
    %c0_i32 = arith.constant 0 : i32
    %c0_i32_0 = arith.constant 0 : i32
    return %arg0, %c0_i32 : i32, i32
  }
  func.func @transform_1(%arg0: i32, %arg1: i32) -> (i32, i32) {
    %c0_i32 = arith.constant 0 : i32
    return %arg0, %arg1 : i32, i32
  }
  func.func @transform_2(%arg0: i32, %arg1: i32) -> (i32, i32) {
    %c0_i32 = arith.constant 0 : i32
    return %arg0, %arg1 : i32, i32
  }
}

</mosaic_0001>

<llo_original>
// kernel: tpu_custom_call.1
$region0: #{tpu_custom_call.1}
  #allocation0 [shape = 'u32[]', space=smem, size = 0x4, offset = 0x4, fixed_abs, tag = 'smem constant byte address 0x4 - core index']
  #allocation1 [shape = 'u32[144,128]{1,0:T(1,128)}', space=vmem, size = 0x12000, scoped, tag = 'internal scratch']
  %s0 = inlined_call_operand.vmem [shape: f32[8,2], index: 0, kind: input, shape index: {}]
  %s1 = inlined_call_operand.hbm [shape: f32[8,1024], index: 1, kind: input, shape index: {}]
  %s2 = inlined_call_operand.hbm [shape: f32[8,1024], index: 2, kind: output, shape index: {}]
  %s3 = sld [smem:[#allocation0]]
  $region22: #{tpu_custom_call.1} parent=0
    _
  %s5 = ssub.s32 1, %s3
  %s6 = scalar_select 0, %s5, %s3
  $region1: #{tpu_custom_call.1} parent=0
    #allocation2 [shape = 'u8[32768]{0}', space=vmem, size = 0x8000, scoped, tag = 'input window, operand 1, single buffered']
    #allocation3 [shape = 's32[1]{0}', space=sflag, size = 0x4, scoped, tag = 'scoped memory for tpu_custom_call.1']
    #allocation4 [shape = 's32[1]{0}', space=sflag, size = 0x4, scoped, tag = 'scoped memory for tpu_custom_call.1']
    #allocation5 [shape = 'u8[32768]{0}', space=vmem, size = 0x8000, scoped, tag = 'output window, operand 0, single buffered']
    %7 = vsyncpa [#allocation3], 0
    %8 = vsyncpa [#allocation4], 0
    // Predicated region
    $region2: #{tpu_custom_call.1} parent=1 // pred_check
      _
    $region3: #{tpu_custom_call.1} parent=1 // pred_check_branch
      %10 = sbr.rel (0) target = $region5
    $region4: #{tpu_custom_call.1} parent=1 // pred_region
      _
    $region5: #{tpu_custom_call.1} parent=1 // pred_fallthru
      _
    // Predicated region
    $region6: #{tpu_custom_call.1} parent=1 // pred_check
      _
    $region7: #{tpu_custom_call.1} parent=1 // pred_check_branch
      %12 = sbr.rel (0) target = $region9
    $region8: #{tpu_custom_call.1} parent=1 // pred_region
      %s14 = ssub.s32 1024, 1024
      %15 = vsyncadd [#allocation3], %s14
      %s17 = sshll.u32 [#allocation2], 4
      %s18 = int_to_ptr.vmem [resolvable:$true] %s17
      %20 = dma.hbm_to_vmem [thread:$0]  %s1, 1024, %s18, [#allocation3]
    $region9: #{tpu_custom_call.1} parent=1 // pred_fallthru
      _
    // Predicated region
    $region10: #{tpu_custom_call.1} parent=1 // pred_check
      _
    $region11: #{tpu_custom_call.1} parent=1 // pred_check_branch
      %22 = sbr.rel (0) target = $region13
    $region12: #{tpu_custom_call.1} parent=1 // pred_region
      %23 = dma.done [#allocation3], 1024
    $region13: #{tpu_custom_call.1} parent=1 // pred_fallthru
      _
    %v24 = vld [vmem:[%s0] sm:$0xff]
    %v25 = vand.u32 2147483647, %v24
    %v26 = vadd.f32 %v25, 1e-12
    %v27 = vmul.f32 %v26, 0.1
    %v28 = vrcp.pop %v27
    %v29 = vmul.f32 1.0, %v28
    %v30 = vmul.f32 %v29, 0.3989423
    %v31 = vlaneseq
    %v32 = vand.u32 %v31, 127
    %v33 = vadd.s32 %v32, 128
    %v34 = vadd.s32 %v32, 256
    %v35 = vadd.s32 %v32, 384
    %v36 = vadd.s32 %v32, 512
    %v37 = vadd.s32 %v32, 640
    %v38 = vadd.s32 %v32, 768
    %v39 = vadd.s32 %v32, 896
    %s40 = smul.u32 0, 1024
    %v41 = vstv %s40
    %v42 = vadd.s32 %v32, %v41
    %v43 = vadd.s32 %v33, %v41
    %v44 = vadd.s32 %v34, %v41
    %v45 = vadd.s32 %v35, %v41
    %v46 = vadd.s32 %v36, %v41
    %v47 = vadd.s32 %v37, %v41
    %v48 = vadd.s32 %v38, %v41
    %v49 = vadd.s32 %v39, %v41
    %v50 = vcvt.s32.f32 %v42
    %v51 = vcvt.s32.f32 %v43
    %v52 = vcvt.s32.f32 %v44
    %v53 = vcvt.s32.f32 %v45
    %v54 = vcvt.s32.f32 %v46
    %v55 = vcvt.s32.f32 %v47
    %v56 = vcvt.s32.f32 %v48
    %v57 = vcvt.s32.f32 %v49
    %v58 = vmul.f32 %v50, 0.0009775171
    %v59 = vmul.f32 %v51, 0.0009775171
    %v60 = vmul.f32 %v52, 0.0009775171
    %v61 = vmul.f32 %v53, 0.0009775171
    %v62 = vmul.f32 %v54, 0.0009775171
    %v63 = vmul.f32 %v55, 0.0009775171
    %v64 = vmul.f32 %v56, 0.0009775171
    %v65 = vmul.f32 %v57, 0.0009775171
    %67 = vset.pattern.permute.xlu0 0
    %68 = vperm.xlu0 %67, %v24
    %v69 = vpop.permute.xlu0 %68
    %v71 = vsub.f32 %v58, %v69
    %v72 = vsub.f32 %v59, %v69
    %v73 = vsub.f32 %v60, %v69
    %v74 = vsub.f32 %v61, %v69
    %v75 = vsub.f32 %v62, %v69
    %v76 = vsub.f32 %v63, %v69
    %v77 = vsub.f32 %v64, %v69
    %v78 = vsub.f32 %v65, %v69
    %80 = vset.pattern.permute.xlu0 1
    %81 = vperm.xlu0 %80, %v29
    %v82 = vpop.permute.xlu0 %81
    %v84 = vmul.f32 %v71, %v82
    %v85 = vmul.f32 %v72, %v82
    %v86 = vmul.f32 %v73, %v82
    %v87 = vmul.f32 %v74, %v82
    %v88 = vmul.f32 %v75, %v82
    %v89 = vmul.f32 %v76, %v82
    %v90 = vmul.f32 %v77, %v82
    %v91 = vmul.f32 %v78, %v82
    %v92 = vmul.f32 %v84, %v84
    %v93 = vmul.f32 %v85, %v85
    %v94 = vmul.f32 %v86, %v86
    %v95 = vmul.f32 %v87, %v87
    %v96 = vmul.f32 %v88, %v88
    %v97 = vmul.f32 %v89, %v89
    %v98 = vmul.f32 %v90, %v90
    %v99 = vmul.f32 %v91, %v91
    %v100 = vmul.f32 %v92, -0.5
    %v101 = vmul.f32 %v93, -0.5
    %v102 = vmul.f32 %v94, -0.5
    %v103 = vmul.f32 %v95, -0.5
    %v104 = vmul.f32 %v96, -0.5
    %v105 = vmul.f32 %v97, -0.5
    %v106 = vmul.f32 %v98, -0.5
    %v107 = vmul.f32 %v99, -0.5
    %v108 = vmul.f32 %v100, 1.442695
    %v109 = vpow.pop %v108
    %v110 = vmul.f32 %v101, 1.442695
    %v111 = vpow.pop %v110
    %v112 = vmul.f32 %v102, 1.442695
    %v113 = vpow.pop %v112
    %v114 = vmul.f32 %v103, 1.442695
    %v115 = vpow.pop %v114
    %v116 = vmul.f32 %v104, 1.442695
    %v117 = vpow.pop %v116
    %v118 = vmul.f32 %v105, 1.442695
    %v119 = vpow.pop %v118
    %v120 = vmul.f32 %v106, 1.442695
    %v121 = vpow.pop %v120
    %v122 = vmul.f32 %v107, 1.442695
    %v123 = vpow.pop %v122
    %125 = vset.pattern.permute.xlu0 1
    %126 = vperm.xlu0 %125, %v30
    %v127 = vpop.permute.xlu0 %126
    %v129 = vmul.f32 %v109, %v127
    %v130 = vmul.f32 %v111, %v127
    %v131 = vmul.f32 %v113, %v127
    %v132 = vmul.f32 %v115, %v127
    %v133 = vmul.f32 %v117, %v127
    %v134 = vmul.f32 %v119, %v127
    %v135 = vmul.f32 %v121, %v127
    %v136 = vmul.f32 %v123, %v127
    %v137 = vld [vmem:[#allocation2] sm:$0xff]
    %v138 = vld [vmem:[#allocation2 + $0x8] sm:$0xff]
    %v139 = vld [vmem:[#allocation2 + $0x10] sm:$0xff]
    %v140 = vld [vmem:[#allocation2 + $0x18] sm:$0xff]
    %v141 = vld [vmem:[#allocation2 + $0x20] sm:$0xff]
    %v142 = vld [vmem:[#allocation2 + $0x28] sm:$0xff]
    %v143 = vld [vmem:[#allocation2 + $0x30] sm:$0xff]
    %v144 = vld [vmem:[#allocation2 + $0x38] sm:$0xff]
    %v145 = vmul.f32 %v137, %v129
    %v146 = vmul.f32 %v138, %v130
    %v147 = vmul.f32 %v139, %v131
    %v148 = vmul.f32 %v140, %v132
    %v149 = vmul.f32 %v141, %v133
    %v150 = vmul.f32 %v142, %v134
    %v151 = vmul.f32 %v143, %v135
    %v152 = vmul.f32 %v144, %v136
    %153 = vst [vmem:[#allocation5] sm:$0xff] %v145
    %154 = vst [vmem:[#allocation5 + $0x8] sm:$0xff] %v146
    %155 = vst [vmem:[#allocation5 + $0x10] sm:$0xff] %v147
    %156 = vst [vmem:[#allocation5 + $0x18] sm:$0xff] %v148
    %157 = vst [vmem:[#allocation5 + $0x20] sm:$0xff] %v149
    %158 = vst [vmem:[#allocation5 + $0x28] sm:$0xff] %v150
    %159 = vst [vmem:[#allocation5 + $0x30] sm:$0xff] %v151
    %160 = vst [vmem:[#allocation5 + $0x38] sm:$0xff] %v152
    // Predicated region
    $region14: #{tpu_custom_call.1} parent=1 // pred_check
      _
    $region15: #{tpu_custom_call.1} parent=1 // pred_check_branch
      %162 = sbr.rel (0) target = $region17
    $region16: #{tpu_custom_call.1} parent=1 // pred_region
      %s164 = ssub.s32 1024, 1024
      %165 = vsyncadd [#allocation4], %s164
      %s167 = sshll.u32 [#allocation5], 4
      %s168 = int_to_ptr.vmem [resolvable:$true] %s167
      %170 = dma.vmem_to_hbm [thread:$0]  %s168, 1024, %s2, [#allocation4]
    $region17: #{tpu_custom_call.1} parent=1 // pred_fallthru
      _
    // Predicated region
    $region18: #{tpu_custom_call.1} parent=1 // pred_check
      _
    $region19: #{tpu_custom_call.1} parent=1 // pred_check_branch
      %172 = sbr.rel (0) target = $region21
    $region20: #{tpu_custom_call.1} parent=1 // pred_region
      %173 = dma.done [#allocation4], 1024
    $region21: #{tpu_custom_call.1} parent=1 // pred_fallthru
      _
    %174 = vsyncpa [#allocation3], 1
    %175 = vsyncpa [#allocation4], 1

</llo_original>
